<compile_context>
chip_gen: v7x
topology: tpu7x:2x2x1
jax: 0.10.0
libtpu: 0.0.40
codegen_flags: <defaults>
</compile_context>

<pallas_src>
import jax
import jax.numpy as jnp
from jax import lax
from jax.experimental import pallas as pl
from jax.experimental.pallas import tpu as pltpu


def _round_up(x, m):
    return ((x + m - 1) // m) * m


def _extract_patches_t(x, kh, kw, stride):
    """Channel-major im2col for a strided conv with kh,kw <= stride.

    x: [N, C, H, W] -> P^T: [K, M], K = C*kh*kw (flattened (c,kh,kw)),
    M = N*Ho*Wo (row-major n,ho,wo).  Built from kh*kw strided slices:
    no gathers, no large intermediates.
    """
    N, C, H, W = x.shape
    Ho = (H - kh) // stride + 1
    Wo = (W - kw) // stride + 1
    rows = []
    for dh in range(kh):
        for dw in range(kw):
            sl = x[:, :,
                   dh: dh + (Ho - 1) * stride + 1: stride,
                   dw: dw + (Wo - 1) * stride + 1: stride]      # (N, C, Ho, Wo)
            rows.append(sl)
    p = jnp.stack(rows, axis=0).reshape(kh, kw, N, C, Ho, Wo)
    p = p.transpose(3, 0, 1, 2, 4, 5)                            # (C, kh, kw, N, Ho, Wo)
    return p.reshape(C * kh * kw, N * Ho * Wo), Ho, Wo


def _stats_kernel(pt_ref, w1t_ref, sum_ref, sq_ref):
    """Phase 1: accumulate per-channel sum(h) and sum(h^2), h = W1^T @ P^T."""
    @pl.when(pl.program_id(0) == 0)
    def _():
        sum_ref[...] = jnp.zeros_like(sum_ref)
        sq_ref[...] = jnp.zeros_like(sq_ref)

    # conv1 as channel-major matmul on the MXU; conv1 bias dropped (cancels in BN).
    h = jnp.dot(w1t_ref[...], pt_ref[...], preferred_element_type=jnp.float32)
    sum_ref[...] += jnp.sum(h, axis=-1, keepdims=True)
    sq_ref[...] += jnp.sum(h * h, axis=-1, keepdims=True)


def _apply_kernel(pt_ref, w1t_ref, scale_ref, shift_ref, w2t_ref, b2_ref, ot_ref):
    """Phase 2: h -> BN affine -> ReLU -> 1x1 conv -> sigmoid, lane-dense [O, TILE_M]."""
    h = jnp.dot(w1t_ref[...], pt_ref[...], preferred_element_type=jnp.float32)
    hr = jnp.maximum(h * scale_ref[...] + shift_ref[...], 0.0)   # f32 elementwise
    y = jnp.dot(w2t_ref[...], hr.astype(w2t_ref.dtype),
                preferred_element_type=jnp.float32) + b2_ref[...]
    ot_ref[...] = jax.nn.sigmoid(y)


def encoder_cnn_small(x, w1, b1, gamma, beta, w2, b2,
                      *, tile_m=2048, compute_dtype=jnp.float32):
    """x: [N, C_in, H, W] f32.  w1: [C_in*4, Hd], w2: [Hd, O].  Returns [N, O, Ho, Wo]."""
    del b1  # conv1 bias cancels exactly under training-mode BatchNorm -> no-op
    N = x.shape[0]
    K, Hd = w1.shape
    O = w2.shape[1]
    f32 = jnp.float32

    pt, Ho, Wo = _extract_patches_t(x, 2, 2, 10)                 # (K, M)
    M = pt.shape[1]

    # lane-dense tiling of the M axis (multiple of 128, large to amortize step cost)
    tm = min(tile_m, _round_up(M, 128))
    m_pad = _round_up(M, tm)
    if m_pad != M:
        pt = jnp.pad(pt, ((0, 0), (0, m_pad - M)))               # zero cols: 0 to BN stats
    grid_m = m_pad // tm

    pt_c = pt.astype(compute_dtype)
    w1t = w1.T.astype(compute_dtype)                             # (Hd, K)
    w2t = w2.T.astype(compute_dtype)                             # (O, Hd)
    itemsize = jnp.dtype(compute_dtype).itemsize

    # ---- phase 1: per-channel sum / sum-of-squares over all M tiles ----
    h_sum, h_sq = pl.pallas_call(
        _stats_kernel,
        out_shape=(jax.ShapeDtypeStruct((Hd, 1), f32),
                   jax.ShapeDtypeStruct((Hd, 1), f32)),
        grid=(grid_m,),
        in_specs=[pl.BlockSpec((K, tm), lambda m: (0, m)),
                  pl.BlockSpec((Hd, K), lambda m: (0, 0))],
        out_specs=(pl.BlockSpec((Hd, 1), lambda m: (0, 0)),
                   pl.BlockSpec((Hd, 1), lambda m: (0, 0))),
        compiler_params=pltpu.CompilerParams(
            dimension_semantics=("arbitrary",),
            vmem_limit_bytes=32 * 1024 * 1024),
        cost_estimate=pl.CostEstimate(
            flops=int(2 * m_pad * K * Hd + 3 * m_pad * Hd),
            transcendentals=0,
            bytes_accessed=int(pt_c.size * itemsize + w1t.size * itemsize + 2 * Hd * 4)),
    )(pt_c, w1t)

    # finalize BatchNorm (training-mode, biased variance, eps=1e-5) as an affine
    inv_m = 1.0 / float(M)
    mean = h_sum * inv_m                                         # (Hd, 1) f32
    var = jnp.maximum(h_sq * inv_m - mean * mean, 0.0)           # one-pass, f32 accum
    scale = gamma.reshape(Hd, 1).astype(f32) * lax.rsqrt(var + 1e-5)
    shift = beta.reshape(Hd, 1).astype(f32) - mean * scale

    # ---- phase 2: recompute h per tile, BN affine + ReLU, 1x1 conv, sigmoid ----
    out_t = pl.pallas_call(
        _apply_kernel,
        out_shape=jax.ShapeDtypeStruct((O, m_pad), f32),
        grid=(grid_m,),
        in_specs=[pl.BlockSpec((K, tm), lambda m: (0, m)),
                  pl.BlockSpec((Hd, K), lambda m: (0, 0)),
                  pl.BlockSpec((Hd, 1), lambda m: (0, 0)),
                  pl.BlockSpec((Hd, 1), lambda m: (0, 0)),
                  pl.BlockSpec((O, Hd), lambda m: (0, 0)),
                  pl.BlockSpec((O, 1), lambda m: (0, 0))],
        out_specs=pl.BlockSpec((O, tm), lambda m: (0, m)),
        compiler_params=pltpu.CompilerParams(
            dimension_semantics=("parallel",),       # megacore sharding on v7x
            vmem_limit_bytes=32 * 1024 * 1024),
        cost_estimate=pl.CostEstimate(
            flops=int(2 * m_pad * K * Hd + 2 * m_pad * Hd * O + 4 * m_pad * Hd),
            transcendentals=int(m_pad * O),
            bytes_accessed=int(pt_c.size * itemsize + w1t.size * itemsize
                               + w2t.size * itemsize + (2 * Hd + O) * 4
                               + O * m_pad * 4)),
    )(pt_c, w1t, scale, shift, w2t, b2.reshape(O, 1).astype(f32))

    # [O, M] -> NCHW [N, O, Ho, Wo]
    return out_t[:, :M].reshape(O, N, Ho, Wo).transpose(1, 0, 2, 3)


def _reference(x, w1, b1, gamma, beta, w2, b2):
    """Pure-JAX reference mirroring the PyTorch forward (training-mode BN)."""
    C_in = x.shape[1]
    Hd = w1.shape[1]
    w1_oihw = w1.T.reshape(Hd, C_in, 2, 2)
    h = lax.conv_general_dilated(
        x, w1_oihw, window_strides=(10, 10), padding="VALID",
        dimension_numbers=("NCHW", "OIHW", "NCHW"),
    ) + b1[None, :, None, None]
    mean = jnp.mean(h, axis=(0, 2, 3), keepdims=True)
    var = jnp.mean((h - mean) ** 2, axis=(0, 2, 3), keepdims=True)
    hn = (h - mean) * lax.rsqrt(var + 1e-5) * gamma[None, :, None, None] + beta[None, :, None, None]
    hr = jnp.maximum(hn, 0.0)
    y = jnp.einsum("nchw,co->nohw", hr, w2) + b2[None, :, None, None]
    return jax.nn.sigmoid(y)


if __name__ == "__main__":
    # Small deterministic config: N=2, C_in=4, H=W=16 -> Ho=Wo=2; hidden=32, num_objects=5.
    N, C_in, H, W = 2, 4, 16, 16
    hidden_dim, num_objects = 32, 5

    key = jax.random.PRNGKey(0)
    kx, kw1, kb1, kw2, kb2 = jax.random.split(key, 5)

    x = jax.random.normal(kx, (N, C_in, H, W), dtype=jnp.float32)

    K = C_in * 2 * 2
    w1 = jax.random.normal(kw1, (K, hidden_dim), dtype=jnp.float32) * 0.1   # conv1 weight, (c,kh,kw)-flattened
    b1 = jax.random.normal(kb1, (hidden_dim,), dtype=jnp.float32) * 0.1
    gamma = jnp.ones((hidden_dim,), dtype=jnp.float32)                       # BatchNorm2d default weight
    beta = jnp.zeros((hidden_dim,), dtype=jnp.float32)                       # BatchNorm2d default bias
    w2 = jax.random.normal(kw2, (hidden_dim, num_objects), dtype=jnp.float32) * 0.1  # 1x1 conv weight
    b2 = jax.random.normal(kb2, (num_objects,), dtype=jnp.float32) * 0.1

    out = jax.block_until_ready(encoder_cnn_small(x, w1, b1, gamma, beta, w2, b2))
    ref = jax.block_until_ready(_reference(x, w1, b1, gamma, beta, w2, b2))

    assert out.shape == (N, num_objects, 2, 2)
    assert jnp.allclose(out, ref, atol=1e-5, rtol=1e-5), float(jnp.max(jnp.abs(out - ref)))

    print("KERNEL_OK")
</pallas_src>

<mosaic_0001>
module attributes {stable_mosaic.version = 11 : i64} {
  func.func @_stats_kernel(%arg0: i32, %arg1: memref<16x128xf32, #tpu.memory_space<vmem>>, %arg2: memref<32x16xf32, #tpu.memory_space<vmem>>, %arg3: memref<32x1xf32, #tpu.memory_space<vmem>>, %arg4: memref<32x1xf32, #tpu.memory_space<vmem>>) attributes {dimension_semantics = [#tpu.dimension_semantics<arbitrary>], iteration_bounds = array<i64: 1>, scalar_prefetch = 0 : i64, scratch_operands = 0 : i64, tpu.core_type = #tpu.core_type<tc>, window_params = [{transform_indices = @transform_0, window_bounds = array<i64: 16, 128>}, {pipeline_mode = #tpu.pipeline_mode<synchronous>, transform_indices = @transform_1, window_bounds = array<i64: 32, 16>}, {pipeline_mode = #tpu.pipeline_mode<synchronous>, transform_indices = @transform_2, window_bounds = array<i64: 32, 1>}, {pipeline_mode = #tpu.pipeline_mode<synchronous>, transform_indices = @transform_3, window_bounds = array<i64: 32, 1>}]} {
    %c0_i32 = arith.constant 0 : i32
    %0 = arith.cmpi eq, %arg0, %c0_i32 : i32
    %1 = arith.extui %0 : i1 to i32
    %c0_i32_0 = arith.constant 0 : i32
    %2 = arith.cmpi ne, %1, %c0_i32_0 : i32
    scf.if %2 {
      %cst_14 = arith.constant 0.000000e+00 : f32
      %17 = vector.broadcast %cst_14 : f32 to vector<32x1xf32>
      %c0_15 = arith.constant 0 : index
      %c0_16 = arith.constant 0 : index
      %18 = vector.load %arg3[%c0_15, %c0_16] : memref<32x1xf32, #tpu.memory_space<vmem>>, vector<32x1xf32>
      tpu.vector_store %arg3[%c0_15, %c0_16], %17 {strides = array<i32>} : memref<32x1xf32, #tpu.memory_space<vmem>>, vector<32x1xf32>,
      %cst_17 = arith.constant 0.000000e+00 : f32
      %19 = vector.broadcast %cst_17 : f32 to vector<32x1xf32>
      %c0_18 = arith.constant 0 : index
      %c0_19 = arith.constant 0 : index
      %20 = vector.load %arg4[%c0_18, %c0_19] : memref<32x1xf32, #tpu.memory_space<vmem>>, vector<32x1xf32>
      tpu.vector_store %arg4[%c0_18, %c0_19], %19 {strides = array<i32>} : memref<32x1xf32, #tpu.memory_space<vmem>>, vector<32x1xf32>,
    } else {
    }
    %c0 = arith.constant 0 : index
    %c0_1 = arith.constant 0 : index
    %3 = vector.load %arg2[%c0, %c0_1] : memref<32x16xf32, #tpu.memory_space<vmem>>, vector<32x16xf32>
    %c0_2 = arith.constant 0 : index
    %c0_3 = arith.constant 0 : index
    %4 = vector.load %arg1[%c0_2, %c0_3] : memref<16x128xf32, #tpu.memory_space<vmem>>, vector<16x128xf32>
    %cst = arith.constant dense<0.000000e+00> : vector<32x128xf32>
    %5 = tpu.matmul %3, %4, %cst {dimension_numbers = #tpu.dot_dimension_numbers<[1], [0], [0], [1], [0, 0, 1, 1], [], []>} : vector<32x16xf32>, vector<16x128xf32>, vector<32x128xf32> -> vector<32x128xf32>
    %c0_4 = arith.constant 0 : index
    %c0_5 = arith.constant 0 : index
    %6 = vector.load %arg3[%c0_4, %c0_5] : memref<32x1xf32, #tpu.memory_space<vmem>>, vector<32x1xf32>
    %cst_6 = arith.constant dense<0.000000e+00> : vector<32xf32>
    %7 = vector.multi_reduction <add>, %5, %cst_6 [1] : vector<32x128xf32> to vector<32xf32>
    %8 = vector.shape_cast %7 : vector<32xf32> to vector<32x1xf32>
    %9 = arith.addf %6, %8 : vector<32x1xf32>
    %c0_7 = arith.constant 0 : index
    %c0_8 = arith.constant 0 : index
    %10 = vector.load %arg3[%c0_7, %c0_8] : memref<32x1xf32, #tpu.memory_space<vmem>>, vector<32x1xf32>
    tpu.vector_store %arg3[%c0_7, %c0_8], %9 {strides = array<i32>} : memref<32x1xf32, #tpu.memory_space<vmem>>, vector<32x1xf32>,
    %c0_9 = arith.constant 0 : index
    %c0_10 = arith.constant 0 : index
    %11 = vector.load %arg4[%c0_9, %c0_10] : memref<32x1xf32, #tpu.memory_space<vmem>>, vector<32x1xf32>
    %12 = arith.mulf %5, %5 : vector<32x128xf32>
    %cst_11 = arith.constant dense<0.000000e+00> : vector<32xf32>
    %13 = vector.multi_reduction <add>, %12, %cst_11 [1] : vector<32x128xf32> to vector<32xf32>
    %14 = vector.shape_cast %13 : vector<32xf32> to vector<32x1xf32>
    %15 = arith.addf %11, %14 : vector<32x1xf32>
    %c0_12 = arith.constant 0 : index
    %c0_13 = arith.constant 0 : index
    %16 = vector.load %arg4[%c0_12, %c0_13] : memref<32x1xf32, #tpu.memory_space<vmem>>, vector<32x1xf32>
    tpu.vector_store %arg4[%c0_12, %c0_13], %15 {strides = array<i32>} : memref<32x1xf32, #tpu.memory_space<vmem>>, vector<32x1xf32>,
    return
  }
  func.func @transform_0(%arg0: i32) -> (i32, i32) {
    %c0_i32 = arith.constant 0 : i32
    %c0_i32_0 = arith.constant 0 : i32
    return %c0_i32, %arg0 : i32, i32
  }
  func.func @transform_1(%arg0: i32) -> (i32, i32) {
    %c0_i32 = arith.constant 0 : i32
    %c0_i32_0 = arith.constant 0 : i32
    %c0_i32_1 = arith.constant 0 : i32
    return %c0_i32, %c0_i32_0 : i32, i32
  }
  func.func @transform_2(%arg0: i32) -> (i32, i32) {
    %c0_i32 = arith.constant 0 : i32
    %c0_i32_0 = arith.constant 0 : i32
    %c0_i32_1 = arith.constant 0 : i32
    return %c0_i32, %c0_i32_0 : i32, i32
  }
  func.func @transform_3(%arg0: i32) -> (i32, i32) {
    %c0_i32 = arith.constant 0 : i32
    %c0_i32_0 = arith.constant 0 : i32
    %c0_i32_1 = arith.constant 0 : i32
    return %c0_i32, %c0_i32_0 : i32, i32
  }
}

</mosaic_0001>

<llo_original>
// kernel: tpu_custom_call.1
$region0: #{tpu_custom_call.1}
  #allocation0 [shape = 'u32[]', space=smem, size = 0x4, offset = 0x4, fixed_abs, tag = 'smem constant byte address 0x4 - core index']
  #allocation1 [shape = 'u32[144,128]{1,0:T(1,128)}', space=vmem, size = 0x12000, scoped, tag = 'internal scratch']
  %s0 = inlined_call_operand.vmem [shape: f32[16,128], index: 0, kind: input, shape index: {}]
  %s1 = inlined_call_operand.vmem [shape: f32[32,16], index: 1, kind: input, shape index: {}]
  %s2 = inlined_call_operand.vmem [shape: f32[32,1], index: 2, kind: output, shape index: {0}]
  %s3 = inlined_call_operand.vmem [shape: f32[32,1], index: 3, kind: output, shape index: {1}]
  %4 = xla_tuple %s2, %s3
  %s5 = sld [smem:[#allocation0]]
  $region30: #{tpu_custom_call.1} parent=0
    _
  %s7 = ssub.s32 1, %s5
  %s8 = scalar_select 0, %s7, %s5
  // Predicated region
  $region2: #{tpu_custom_call.1} parent=0 // pred_check
    _
  $region3: #{tpu_custom_call.1} parent=0 // pred_check_branch
    %10 = sbr.rel (0) target = $region5
  $region4: #{tpu_custom_call.1} parent=0 // pred_region
    _
  $region5: #{tpu_custom_call.1} parent=0 // pred_fallthru
    _
  // Predicated region
  $region6: #{tpu_custom_call.1} parent=0 // pred_check
    _
  $region7: #{tpu_custom_call.1} parent=0 // pred_check_branch
    %12 = sbr.rel (0) target = $region9
  $region8: #{tpu_custom_call.1} parent=0 // pred_region
    _
  $region9: #{tpu_custom_call.1} parent=0 // pred_fallthru
    _
  %p13 = scmp.eq.s32.totalorder 0, 0
  // Predicated region
  $region10: #{tpu_custom_call.1} parent=0 // pred_check
    %p14 = pneg %p13
  $region11: #{tpu_custom_call.1} parent=0 // pred_check_branch
    %16 = sbr.rel (%p14) target = $region13
  $region12: #{tpu_custom_call.1} parent=0 // pred_region
    %vm17 = vcmask 7168
    %18 = vst.msk [vmem:[%s2] sm:$0xff] %vm17, 0.0
    %19 = vst.msk [vmem:[%s2 + $0x8] sm:$0xff] %vm17, 0.0
    %20 = vst.msk [vmem:[%s2 + $0x10] sm:$0xff] %vm17, 0.0
    %21 = vst.msk [vmem:[%s2 + $0x18] sm:$0xff] %vm17, 0.0
    %22 = vst.msk [vmem:[%s3] sm:$0xff] %vm17, 0.0
    %23 = vst.msk [vmem:[%s3 + $0x8] sm:$0xff] %vm17, 0.0
    %24 = vst.msk [vmem:[%s3 + $0x10] sm:$0xff] %vm17, 0.0
    %25 = vst.msk [vmem:[%s3 + $0x18] sm:$0xff] %vm17, 0.0
  $region13: #{tpu_custom_call.1} parent=0 // pred_fallthru
    _
  %v26 = vld [vmem:[%s1] sm:$0xff]
  %v27 = vld [vmem:[%s1 + $0x8] sm:$0xff]
  %v28 = vld [vmem:[%s1 + $0x10] sm:$0xff]
  %v29 = vld [vmem:[%s1 + $0x18] sm:$0xff]
  %v30 = vld [vmem:[%s0] sm:$0xff]
  %v31 = vld [vmem:[%s0 + $0x8] sm:$0xff]
  %vm32 = vcmask 130048
  %v34 = vsel %vm32, %v26, 0
  %v37 = vsel %vm32, %v27, 0
  %v40 = vsel %vm32, %v28, 0
  %v43 = vsel %vm32, %v29, 0
  %45 = vmatprep.subr.mxu0 0.0
  %46 = vmatpush1.msra.mxu0 %v30
  %47 = vmatprep.subr.mxu0 0.0
  %48 = vmatpush1.msra.mxu0 %v31
  %49 = vmatprep.subr.mxu0 0.0
  %50 = vmatpush1.msra.mxu0 0.0
  %51 = vmatprep.subr.mxu0 0.0
  %52 = vmatpush1.msra.mxu0 0.0
  %53 = vmatprep.subr.mxu0 0.0
  %54 = vmatpush1.msra.mxu0 0.0
  %55 = vmatprep.subr.mxu0 0.0
  %56 = vmatpush1.msra.mxu0 0.0
  %57 = vmatprep.subr.mxu0 0.0
  %58 = vmatpush1.msra.mxu0 0.0
  %59 = vmatprep.subr.mxu0 0.0
  %60 = vmatpush1.msra.mxu0 0.0
  %61 = vmatprep.subr.mxu0 0.0
  %62 = vmatpush1.msra.mxu0 0.0
  %63 = vmatprep.subr.mxu0 0.0
  %64 = vmatpush1.msra.mxu0 0.0
  %65 = vmatprep.subr.mxu0 0.0
  %66 = vmatpush1.msra.mxu0 0.0
  %67 = vmatprep.subr.mxu0 0.0
  %68 = vmatpush1.msra.mxu0 0.0
  %69 = vmatprep.subr.mxu0 0.0
  %70 = vmatpush1.msra.mxu0 0.0
  %71 = vmatprep.subr.mxu0 0.0
  %72 = vmatpush1.msra.mxu0 0.0
  %73 = vmatprep.subr.mxu0 0.0
  %74 = vmatpush1.msra.mxu0 0.0
  %75 = vmatprep.subr.mxu0 0.0
  %76 = vmatpush1.msra.mxu0 0.0
  %77 = vmatprep.subr.mxu0 0.0
  %78 = vmatpush1.msra.mxu0 0.0
  %79 = vmatprep.subr.mxu0 0.0
  %80 = vmatpush1.msra.mxu0 0.0
  %81 = vmatprep.subr.mxu0 0.0
  %82 = vmatpush1.msra.mxu0 0.0
  %83 = vmatprep.subr.mxu0 0.0
  %84 = vmatpush1.msra.mxu0 0.0
  %85 = vmatprep.subr.mxu0 0.0
  %86 = vmatpush1.msra.mxu0 0.0
  %87 = vmatprep.subr.mxu0 0.0
  %88 = vmatpush1.msra.mxu0 0.0
  %89 = vmatprep.subr.mxu0 0.0
  %90 = vmatpush1.msra.mxu0 0.0
  %91 = vmatprep.subr.mxu0 0.0
  %92 = vmatpush1.msra.mxu0 0.0
  %93 = vmatprep.subr.mxu0 0.0
  %94 = vmatpush1.msra.mxu0 0.0
  %95 = vmatprep.subr.mxu0 0.0
  %96 = vmatpush1.msra.mxu0 0.0
  %97 = vmatprep.subr.mxu0 0.0
  %98 = vmatpush1.msra.mxu0 0.0
  %99 = vmatprep.subr.mxu0 0.0
  %100 = vmatpush1.msra.mxu0 0.0
  %101 = vmatprep.subr.mxu0 0.0
  %102 = vmatpush1.msra.mxu0 0.0
  %103 = vmatprep.subr.mxu0 0.0
  %104 = vmatpush1.msra.mxu0 0.0
  %105 = vmatprep.subr.mxu0 0.0
  %106 = vmatpush1.msra.mxu0 0.0
  %107 = vmatprep.subr.mxu0 0.0
  %108 = vmatpush1.msra.mxu0 0.0
  %109 = vmatprep.mubr.f32.mxu0 0.0
  %110 = vmatmul.mubr.f32.gmra.mrb[0].mxu0 %v34
  %v111 = vpop.f32.mrb[0].mxu0
  %v112 = vadd.f32 0.0, %v111
  %v113 = vpop.f32.mrb[0].mxu0
  %114 = vmatprep.mubr.f32.mxu0 0.0
  %115 = vmatmul.mubr.f32.gmra.mrb[0].mxu0 %v37
  %v116 = vpop.f32.mrb[0].mxu0
  %v117 = vadd.f32 0.0, %v116
  %v118 = vpop.f32.mrb[0].mxu0
  %119 = vmatprep.mubr.f32.mxu0 0.0
  %120 = vmatmul.mubr.f32.gmra.mrb[0].mxu0 %v40
  %v121 = vpop.f32.mrb[0].mxu0
  %v122 = vadd.f32 0.0, %v121
  %v123 = vpop.f32.mrb[0].mxu0
  %124 = vmatprep.mubr.f32.mxu0 0.0
  %125 = vmatmul.mubr.f32.gmra.mrb[0].mxu0 %v43
  %v126 = vpop.f32.mrb[0].mxu0
  %v127 = vadd.f32 0.0, %v126
  %v128 = vpop.f32.mrb[0].mxu0
  %129 = vdwg.mxu0
  %v130 = vld [vmem:[%s2] sm:$0xff]
  %v131 = vld [vmem:[%s2 + $0x8] sm:$0xff]
  %v132 = vld [vmem:[%s2 + $0x10] sm:$0xff]
  %v133 = vld [vmem:[%s2 + $0x18] sm:$0xff]
  %134 = vadd.xlane.f32.xlu0 %v112
  %v135 = vpop.xlane.xlu0 %134
  %136 = vadd.xlane.f32.xlu0 %v117
  %v137 = vpop.xlane.xlu0 %136
  %138 = vadd.xlane.f32.xlu0 %v122
  %v139 = vpop.xlane.xlu0 %138
  %140 = vadd.xlane.f32.xlu0 %v127
  %v141 = vpop.xlane.xlu0 %140
  %v142 = vadd.f32 %v130, %v135
  %v143 = vadd.f32 %v131, %v137
  %v144 = vadd.f32 %v132, %v139
  %v145 = vadd.f32 %v133, %v141
  %vm146 = vcmask 7168
  %147 = vst.msk [vmem:[%s2] sm:$0xff] %vm146, %v142
  %148 = vst.msk [vmem:[%s2 + $0x8] sm:$0xff] %vm146, %v143
  %149 = vst.msk [vmem:[%s2 + $0x10] sm:$0xff] %vm146, %v144
  %150 = vst.msk [vmem:[%s2 + $0x18] sm:$0xff] %vm146, %v145
  %v151 = vld [vmem:[%s3] sm:$0xff]
  %v152 = vld [vmem:[%s3 + $0x8] sm:$0xff]
  %v153 = vld [vmem:[%s3 + $0x10] sm:$0xff]
  %v154 = vld [vmem:[%s3 + $0x18] sm:$0xff]
  %v155 = vmul.f32 %v112, %v112
  %v156 = vmul.f32 %v117, %v117
  %v157 = vmul.f32 %v122, %v122
  %v158 = vmul.f32 %v127, %v127
  %159 = vadd.xlane.f32.xlu0 %v155
  %v160 = vpop.xlane.xlu0 %159
  %161 = vadd.xlane.f32.xlu0 %v156
  %v162 = vpop.xlane.xlu0 %161
  %163 = vadd.xlane.f32.xlu0 %v157
  %v164 = vpop.xlane.xlu0 %163
  %165 = vadd.xlane.f32.xlu0 %v158
  %v166 = vpop.xlane.xlu0 %165
  %v167 = vadd.f32 %v151, %v160
  %v168 = vadd.f32 %v152, %v162
  %v169 = vadd.f32 %v153, %v164
  %v170 = vadd.f32 %v154, %v166
  %171 = vst.msk [vmem:[%s3] sm:$0xff] %vm146, %v167
  %172 = vst.msk [vmem:[%s3 + $0x8] sm:$0xff] %vm146, %v168
  %173 = vst.msk [vmem:[%s3 + $0x10] sm:$0xff] %vm146, %v169
  %174 = vst.msk [vmem:[%s3 + $0x18] sm:$0xff] %vm146, %v170
  // Predicated region
  $region14: #{tpu_custom_call.1} parent=0 // pred_check
    _
  $region15: #{tpu_custom_call.1} parent=0 // pred_check_branch
    %176 = sbr.rel (0) target = $region17
  $region16: #{tpu_custom_call.1} parent=0 // pred_region
    _
  $region17: #{tpu_custom_call.1} parent=0 // pred_fallthru
    _
  // Predicated region
  $region18: #{tpu_custom_call.1} parent=0 // pred_check
    _
  $region19: #{tpu_custom_call.1} parent=0 // pred_check_branch
    %178 = sbr.rel (0) target = $region21
  $region20: #{tpu_custom_call.1} parent=0 // pred_region
    _
  $region21: #{tpu_custom_call.1} parent=0 // pred_fallthru
    _
  // Predicated region
  $region22: #{tpu_custom_call.1} parent=0 // pred_check
    _
  $region23: #{tpu_custom_call.1} parent=0 // pred_check_branch
    %180 = sbr.rel (0) target = $region25
  $region24: #{tpu_custom_call.1} parent=0 // pred_region
    _
  $region25: #{tpu_custom_call.1} parent=0 // pred_fallthru
    _
  // Predicated region
  $region26: #{tpu_custom_call.1} parent=0 // pred_check
    _
  $region27: #{tpu_custom_call.1} parent=0 // pred_check_branch
    %182 = sbr.rel (0) target = $region29
  $region28: #{tpu_custom_call.1} parent=0 // pred_region
    _
  $region29: #{tpu_custom_call.1} parent=0 // pred_fallthru
    _

</llo_original>
